<compile_context>
chip_gen: v6e
topology: v6e:2x2x1
jax: 0.10.0
libtpu: 0.0.40
codegen_flags: <defaults>
</compile_context>

<pallas_src>
import jax
import jax.numpy as jnp
from jax.experimental import pallas as pl
from jax.experimental.pallas import tpu as pltpu


O_PAD = 8  # lightly-padded output width (useful O=3; 32 B/row f32 writeback)


def regression_head_kernel(x_ref, w1_ref, b1_ref, w2_ref, b2_ref, o_ref):
    # x_ref  : [tb, H]     f32/bf16 (streamed feature tile, native dtype)
    # w1_ref : [H, H]      bf16     (dense weight, stored [in, out], resident)
    # b1_ref : [1, H]      f32      (dense bias)
    # w2_ref : [H, O_PAD]  bf16     (6 * out_proj weight, zero-padded, [in, out])
    # b2_ref : [1, O_PAD]  f32      (6 * out_proj bias - 3, zero-padded)
    # o_ref  : [tb, O_PAD] f32      (lightly-padded output)
    x = x_ref[...].astype(jnp.bfloat16)  # in-kernel cast, hidden under DMA
    h = jnp.dot(x, w1_ref[...], preferred_element_type=jnp.float32)
    h = jnp.tanh(h + b1_ref[...])                      # f32 elementwise (v5e-safe)
    y = jnp.dot(h.astype(jnp.bfloat16), w2_ref[...],
                preferred_element_type=jnp.float32)    # bf16 MXU, f32 accumulate
    o_ref[...] = (y + b2_ref[...]).astype(o_ref.dtype)


def _choose_tb(B, target_rows=2048, min_grid=2):
    """Pick a sublane-aligned (multiple-of-8) batch tile <= target_rows.
    The wrapper zero-pads the batch up to a multiple of tb, so tb need not
    divide B.  Prefer an even grid with >= 4 steps so v7x's two TensorCores
    each get >= 2 pipelined steps."""
    B8 = ((B + 7) // 8) * 8
    if B8 <= target_rows:
        cands = [t for t in range(8, B8 + 1, 8) if B8 % t == 0]
        for pred in (lambda g: g >= 4 and g % 2 == 0,
                     lambda g: g >= min_grid and g % 2 == 0,
                     lambda g: g >= min_grid):
            sel = [t for t in cands if pred(B8 // t)]
            if sel:
                return max(sel)
        return B8
    # Large batch: biggest tile <= target_rows; shave down (in steps of 8)
    # until the padded grid is even (cheap, one-time Python).
    tb = target_rows - (target_rows % 8)
    while tb > 8 and pl.cdiv(B8, tb) % 2 != 0:
        tb -= 8
    return tb


def prepare_params(w1, b1, w2, b2):
    """One-time static parameter transform (do offline, not per call):
       * cast matmul weights to bf16 (f32 accumulation keeps accuracy),
       * fold the final 6*y - 3 affine into out_proj,
       * zero-pad the O=3 output dim lightly to O_PAD=8."""
    H, O = w2.shape
    w1_bf = w1.astype(jnp.bfloat16)
    b1_2d = b1.reshape(1, H).astype(jnp.float32)
    w2_pad = (jnp.zeros((H, O_PAD), jnp.float32)
              .at[:, :O].set(6.0 * w2.astype(jnp.float32))
              .astype(jnp.bfloat16))
    b2_pad = jnp.zeros((1, O_PAD), jnp.float32).at[:, :O].set(
        6.0 * b2.astype(jnp.float32) - 3.0)
    return w1_bf, b1_2d, w2_pad, b2_pad, O


def regression_head(features, w1_bf, b1_2d, w2_pad, b2_pad, o_dim, *, tb=None):
    """features: [B, H] (f32 or bf16, streamed as-is). Returns [B, o_dim] float32."""
    B, H = features.shape
    O_out = w2_pad.shape[1]

    if tb is None:
        tb = _choose_tb(B)
    tb = max(8, (tb // 8) * 8)

    # Pad the batch up to a multiple of the tile (never a single giant block).
    B_pad = pl.cdiv(B, tb) * tb
    x = features
    if B_pad != B:
        x = jnp.pad(x, ((0, B_pad - B), (0, 0)))

    grid = (B_pad // tb,)
    out = pl.pallas_call(
        regression_head_kernel,
        out_shape=jax.ShapeDtypeStruct((B_pad, O_out), jnp.float32),
        grid_spec=pltpu.PrefetchScalarGridSpec(
            num_scalar_prefetch=0,
            grid=grid,
            in_specs=[
                pl.BlockSpec((tb, H), lambda i: (i, 0)),        # streamed feature tile
                pl.BlockSpec((H, H), lambda i: (0, 0)),         # dense weight (resident)
                pl.BlockSpec((1, H), lambda i: (0, 0)),         # dense bias
                pl.BlockSpec((H, O_out), lambda i: (0, 0)),     # folded out_proj weight
                pl.BlockSpec((1, O_out), lambda i: (0, 0)),     # folded out_proj bias
            ],
            out_specs=pl.BlockSpec((tb, O_out), lambda i: (i, 0)),
        ),
        compiler_params=pltpu.CompilerParams(
            dimension_semantics=("parallel",),
        ),
    )(x, w1_bf, b1_2d, w2_pad, b2_pad)
    # Tiny [B_pad, 8] slice; fuse into the consumer in real use.
    return out[:B, :o_dim]


def reference(features, w1, b1, w2, b2):
    """Reference with the same bf16 rounding of the matmul operands."""
    x = features.astype(jnp.bfloat16).astype(jnp.float32)
    w1r = w1.astype(jnp.bfloat16).astype(jnp.float32)
    h = jnp.tanh(x @ w1r + b1)
    hr = h.astype(jnp.bfloat16).astype(jnp.float32)
    w2r = (6.0 * w2).astype(jnp.bfloat16).astype(jnp.float32)
    return hr @ w2r + (6.0 * b2 - 3.0)


if __name__ == "__main__":
    # config.hidden_size = 32, output dim = 3 (fixed by the module).
    # B=64 gives a multi-step even grid: tb=16 -> grid=(4,).
    B, H, O = 64, 32, 3

    key = jax.random.PRNGKey(0)
    k_x, k_w1, k_b1, k_w2, k_b2 = jax.random.split(key, 5)

    features = jax.random.normal(k_x, (B, H), dtype=jnp.float32)
    # Parameters stored as [in, out] (i.e. W.T of the torch Linear weights).
    w1 = jax.random.normal(k_w1, (H, H), dtype=jnp.float32) * (1.0 / jnp.sqrt(H))
    b1 = jax.random.normal(k_b1, (H,), dtype=jnp.float32) * 0.01
    w2 = jax.random.normal(k_w2, (H, O), dtype=jnp.float32) * (1.0 / jnp.sqrt(H))
    b2 = jax.random.normal(k_b2, (O,), dtype=jnp.float32) * 0.01

    # One-time parameter prep (bf16 weights, affine fold, light output padding).
    w1_bf, b1_2d, w2_pad, b2_pad, o_dim = prepare_params(w1, b1, w2, b2)

    out = regression_head(features, w1_bf, b1_2d, w2_pad, b2_pad, o_dim)
    out = jax.block_until_ready(out)

    ref = reference(features, w1, b1, w2, b2)
    assert out.shape == (B, O), out.shape
    assert jnp.allclose(out, ref, atol=2e-2, rtol=2e-2), (out, ref)

    print("KERNEL_OK")
</pallas_src>

<mosaic_0001>
module attributes {stable_mosaic.version = 11 : i64} {
  func.func @regression_head_kernel(%arg0: i32, %arg1: memref<16x32xf32, #tpu.memory_space<vmem>>, %arg2: memref<32x32xbf16, #tpu.memory_space<vmem>>, %arg3: memref<1x32xf32, #tpu.memory_space<vmem>>, %arg4: memref<32x8xbf16, #tpu.memory_space<vmem>>, %arg5: memref<1x8xf32, #tpu.memory_space<vmem>>, %arg6: memref<16x8xf32, #tpu.memory_space<vmem>>) attributes {dimension_semantics = [#tpu.dimension_semantics<parallel>], iteration_bounds = array<i64: 4>, scalar_prefetch = 0 : i64, scratch_operands = 0 : i64, tpu.core_type = #tpu.core_type<tc>, window_params = [{transform_indices = @transform_0, window_bounds = array<i64: 16, 32>}, {pipeline_mode = #tpu.pipeline_mode<synchronous>, transform_indices = @transform_1, window_bounds = array<i64: 32, 32>}, {pipeline_mode = #tpu.pipeline_mode<synchronous>, transform_indices = @transform_2, window_bounds = array<i64: 1, 32>}, {pipeline_mode = #tpu.pipeline_mode<synchronous>, transform_indices = @transform_3, window_bounds = array<i64: 32, 8>}, {pipeline_mode = #tpu.pipeline_mode<synchronous>, transform_indices = @transform_4, window_bounds = array<i64: 1, 8>}, {transform_indices = @transform_5, window_bounds = array<i64: 16, 8>}]} {
    %c0 = arith.constant 0 : index
    %c0_0 = arith.constant 0 : index
    %0 = vector.load %arg1[%c0, %c0_0] : memref<16x32xf32, #tpu.memory_space<vmem>>, vector<16x32xf32>
    %1 = arith.truncf %0 : vector<16x32xf32> to vector<16x32xbf16>
    %c0_1 = arith.constant 0 : index
    %c0_2 = arith.constant 0 : index
    %2 = vector.load %arg2[%c0_1, %c0_2] : memref<32x32xbf16, #tpu.memory_space<vmem>>, vector<32x32xbf16>
    %cst = arith.constant dense<0.000000e+00> : vector<16x32xf32>
    %3 = tpu.matmul %1, %2, %cst {dimension_numbers = #tpu.dot_dimension_numbers<[1], [0], [0], [1], [0, 0, 1, 1], [], []>} : vector<16x32xbf16>, vector<32x32xbf16>, vector<16x32xf32> -> vector<16x32xf32>
    %c0_3 = arith.constant 0 : index
    %c0_4 = arith.constant 0 : index
    %4 = vector.load %arg3[%c0_3, %c0_4] : memref<1x32xf32, #tpu.memory_space<vmem>>, vector<1x32xf32>
    %5 = vector.broadcast %4 : vector<1x32xf32> to vector<16x32xf32>
    %6 = arith.addf %3, %5 : vector<16x32xf32>
    %7 = math.tanh %6 : vector<16x32xf32>
    %8 = arith.truncf %7 : vector<16x32xf32> to vector<16x32xbf16>
    %c0_5 = arith.constant 0 : index
    %c0_6 = arith.constant 0 : index
    %9 = vector.load %arg4[%c0_5, %c0_6] : memref<32x8xbf16, #tpu.memory_space<vmem>>, vector<32x8xbf16>
    %cst_7 = arith.constant dense<0.000000e+00> : vector<16x8xf32>
    %10 = tpu.matmul %8, %9, %cst_7 {dimension_numbers = #tpu.dot_dimension_numbers<[1], [0], [0], [1], [0, 0, 1, 1], [], []>} : vector<16x32xbf16>, vector<32x8xbf16>, vector<16x8xf32> -> vector<16x8xf32>
    %c0_8 = arith.constant 0 : index
    %c0_9 = arith.constant 0 : index
    %11 = vector.load %arg5[%c0_8, %c0_9] : memref<1x8xf32, #tpu.memory_space<vmem>>, vector<1x8xf32>
    %12 = vector.broadcast %11 : vector<1x8xf32> to vector<16x8xf32>
    %13 = arith.addf %10, %12 : vector<16x8xf32>
    %c0_10 = arith.constant 0 : index
    %c0_11 = arith.constant 0 : index
    %14 = vector.load %arg6[%c0_10, %c0_11] : memref<16x8xf32, #tpu.memory_space<vmem>>, vector<16x8xf32>
    tpu.vector_store %arg6[%c0_10, %c0_11], %13 {strides = array<i32>} : memref<16x8xf32, #tpu.memory_space<vmem>>, vector<16x8xf32>,
    return
  }
  func.func @transform_0(%arg0: i32) -> (i32, i32) {
    %c0_i32 = arith.constant 0 : i32
    %c0_i32_0 = arith.constant 0 : i32
    return %arg0, %c0_i32 : i32, i32
  }
  func.func @transform_1(%arg0: i32) -> (i32, i32) {
    %c0_i32 = arith.constant 0 : i32
    %c0_i32_0 = arith.constant 0 : i32
    %c0_i32_1 = arith.constant 0 : i32
    return %c0_i32, %c0_i32_0 : i32, i32
  }
  func.func @transform_2(%arg0: i32) -> (i32, i32) {
    %c0_i32 = arith.constant 0 : i32
    %c0_i32_0 = arith.constant 0 : i32
    %c0_i32_1 = arith.constant 0 : i32
    return %c0_i32, %c0_i32_0 : i32, i32
  }
  func.func @transform_3(%arg0: i32) -> (i32, i32) {
    %c0_i32 = arith.constant 0 : i32
    %c0_i32_0 = arith.constant 0 : i32
    %c0_i32_1 = arith.constant 0 : i32
    return %c0_i32, %c0_i32_0 : i32, i32
  }
  func.func @transform_4(%arg0: i32) -> (i32, i32) {
    %c0_i32 = arith.constant 0 : i32
    %c0_i32_0 = arith.constant 0 : i32
    %c0_i32_1 = arith.constant 0 : i32
    return %c0_i32, %c0_i32_0 : i32, i32
  }
  func.func @transform_5(%arg0: i32) -> (i32, i32) {
    %c0_i32 = arith.constant 0 : i32
    %c0_i32_0 = arith.constant 0 : i32
    return %arg0, %c0_i32 : i32, i32
  }
}

</mosaic_0001>

<llo_original>
// kernel: tpu_custom_call.1
$region0: #{tpu_custom_call.1}
  #allocation0 [shape = 'u32[]', space=smem, size = 0x4, offset = 0x4, fixed_abs, tag = 'smem constant byte address 0x4 - core index']
  #allocation1 [shape = 'u32[144,128]{1,0:T(1,128)}', space=vmem, size = 0x12000, scoped, tag = 'internal scratch']
  %s0 = inlined_call_operand.vmem [shape: f32[64,32], index: 0, kind: input, shape index: {}]
  %s1 = inlined_call_operand.vmem [shape: bf16[32,32], index: 1, kind: input, shape index: {}]
  %s2 = inlined_call_operand.vmem [shape: f32[1,32], index: 2, kind: input, shape index: {}]
  %s3 = inlined_call_operand.vmem [shape: bf16[32,8], index: 3, kind: input, shape index: {}]
  %s4 = inlined_call_operand.vmem [shape: f32[1,8], index: 4, kind: input, shape index: {}]
  %s5 = inlined_call_operand.vmem [shape: f32[64,8], index: 5, kind: output, shape index: {}]
  %s6 = sld [smem:[#allocation0]]
  $region53: #{tpu_custom_call.1} parent=0
    _
  %s8 = ssub.s32 1, %s6
  %s9 = scalar_select 0, %s8, %s6
  loop: start=0, step=1, limit=6
  $region2: #{tpu_custom_call.1} parent=0 // loop_pre_header
    _
  $region3: #{tpu_custom_call.1} parent=0 // loop_header
    %s11 = sphi 0, %s15
    %p12 = scmp.ge.s32.totalorder %s11, 6
    %s21 = sphi 0, %s23
    %s24 = sphi 0, %s21
    %s25 = sphi 0, %s24
    %s41 = sphi 0, %s25
    %s45 = sphi 0, %s45
    %s47 = sphi 0, %s45
    %s48 = sphi 0, %s47
    %s62 = sphi 0, %s48
    %s66 = sphi 0, %s66
    %s68 = sphi 0, %s66
    %s69 = sphi 0, %s68
    %s83 = sphi 0, %s69
    %s87 = sphi 0, %s87
    %s89 = sphi 0, %s87
    %s90 = sphi 0, %s89
    %s104 = sphi 0, %s90
    %s108 = sphi 0, %s108
    %s110 = sphi 0, %s108
    %s111 = sphi 0, %s110
    %s125 = sphi 0, %s111
    %s131 = sphi 0, %s133
    %s134 = sphi 0, %s131
    %s135 = sphi 0, %s134
    %s151 = sphi 0, %s135
  $region4: #{tpu_custom_call.1} parent=0 // loop_header_branch
    %14 = sbr.rel (%p12) target = $region8
  $region5: #{tpu_custom_call.1} parent=0 // loop_body
    %s16 = ssub.s32 %s11, 1
    %s17 = ssub.s32 %s11, 2
    %s18 = sadd.s32 %s11, 1
    %s19 = ssub.s32 %s11, %s18
    %p20 = scmp.eq.s32.totalorder %s19, 0
    %s22 = sadd.s32 %s21, 1
    %s23 = scalar_select %p20, %s21, %s22
    %p26 = pneg %p20
    %p27 = scmp.eq.s32.totalorder %s11, 3
    %p28 = por %p26, %p27
    %p29 = scmp.ne.s32.totalorder %s21, %s24
    %p30 = scmp.eq.s32.totalorder %s11, 0
    %p31 = por %p29, %p30
    %p32 = scmp.ne.s32.totalorder %s21, %s24
    %p33 = scmp.eq.s32.totalorder %s16, 3
    %p34 = por %p32, %p33
    %p35 = scmp.ne.s32.totalorder %s24, %s25
    %p36 = scmp.eq.s32.totalorder %s16, 0
    %p37 = por %p35, %p36
    %p38 = scmp.ne.s32.totalorder %s24, %s25
    %p39 = scmp.eq.s32.totalorder %s17, 3
    %p40 = por %p38, %p39
    %p42 = scmp.ne.s32.totalorder %s25, %s41
    %p43 = scmp.eq.s32.totalorder %s17, 0
    %p44 = por %p42, %p43
    %s46 = sadd.s32 %s45, 1
    %p49 = scmp.eq.s32.totalorder %s11, 3
    %p50 = scmp.ne.s32.totalorder %s45, %s47
    %p51 = scmp.eq.s32.totalorder %s11, 0
    %p52 = por %p50, %p51
    %p53 = scmp.ne.s32.totalorder %s45, %s47
    %p54 = scmp.eq.s32.totalorder %s16, 3
    %p55 = por %p53, %p54
    %p56 = scmp.ne.s32.totalorder %s47, %s48
    %p57 = scmp.eq.s32.totalorder %s16, 0
    %p58 = por %p56, %p57
    %p59 = scmp.ne.s32.totalorder %s47, %s48
    %p60 = scmp.eq.s32.totalorder %s17, 3
    %p61 = por %p59, %p60
    %p63 = scmp.ne.s32.totalorder %s48, %s62
    %p64 = scmp.eq.s32.totalorder %s17, 0
    %p65 = por %p63, %p64
    %s67 = sadd.s32 %s66, 1
    %p70 = scmp.eq.s32.totalorder %s11, 3
    %p71 = scmp.ne.s32.totalorder %s66, %s68
    %p72 = scmp.eq.s32.totalorder %s11, 0
    %p73 = por %p71, %p72
    %p74 = scmp.ne.s32.totalorder %s66, %s68
    %p75 = scmp.eq.s32.totalorder %s16, 3
    %p76 = por %p74, %p75
    %p77 = scmp.ne.s32.totalorder %s68, %s69
    %p78 = scmp.eq.s32.totalorder %s16, 0
    %p79 = por %p77, %p78
    %p80 = scmp.ne.s32.totalorder %s68, %s69
    %p81 = scmp.eq.s32.totalorder %s17, 3
    %p82 = por %p80, %p81
    %p84 = scmp.ne.s32.totalorder %s69, %s83
    %p85 = scmp.eq.s32.totalorder %s17, 0
    %p86 = por %p84, %p85
    %s88 = sadd.s32 %s87, 1
    %p91 = scmp.eq.s32.totalorder %s11, 3
    %p92 = scmp.ne.s32.totalorder %s87, %s89
    %p93 = scmp.eq.s32.totalorder %s11, 0
    %p94 = por %p92, %p93
    %p95 = scmp.ne.s32.totalorder %s87, %s89
    %p96 = scmp.eq.s32.totalorder %s16, 3
    %p97 = por %p95, %p96
    %p98 = scmp.ne.s32.totalorder %s89, %s90
    %p99 = scmp.eq.s32.totalorder %s16, 0
    %p100 = por %p98, %p99
    %p101 = scmp.ne.s32.totalorder %s89, %s90
    %p102 = scmp.eq.s32.totalorder %s17, 3
    %p103 = por %p101, %p102
    %p105 = scmp.ne.s32.totalorder %s90, %s104
    %p106 = scmp.eq.s32.totalorder %s17, 0
    %p107 = por %p105, %p106
    %s109 = sadd.s32 %s108, 1
    %p112 = scmp.eq.s32.totalorder %s11, 3
    %p113 = scmp.ne.s32.totalorder %s108, %s110
    %p114 = scmp.eq.s32.totalorder %s11, 0
    %p115 = por %p113, %p114
    %p116 = scmp.ne.s32.totalorder %s108, %s110
    %p117 = scmp.eq.s32.totalorder %s16, 3
    %p118 = por %p116, %p117
    %p119 = scmp.ne.s32.totalorder %s110, %s111
    %p120 = scmp.eq.s32.totalorder %s16, 0
    %p121 = por %p119, %p120
    %p122 = scmp.ne.s32.totalorder %s110, %s111
    %p123 = scmp.eq.s32.totalorder %s17, 3
    %p124 = por %p122, %p123
    %p126 = scmp.ne.s32.totalorder %s111, %s125
    %p127 = scmp.eq.s32.totalorder %s17, 0
    %p128 = por %p126, %p127
    %s129 = ssub.s32 %s11, %s18
    %p130 = scmp.eq.s32.totalorder %s129, 0
    %s132 = sadd.s32 %s131, 1
    %s133 = scalar_select %p130, %s131, %s132
    %p136 = pneg %p130
    %p137 = scmp.eq.s32.totalorder %s11, 3
    %p138 = por %p136, %p137
    %p139 = scmp.ne.s32.totalorder %s131, %s134
    %p140 = scmp.eq.s32.totalorder %s11, 0
    %p141 = por %p139, %p140
    %p142 = scmp.ne.s32.totalorder %s131, %s134
    %p143 = scmp.eq.s32.totalorder %s16, 3
    %p144 = por %p142, %p143
    %p145 = scmp.ne.s32.totalorder %s134, %s135
    %p146 = scmp.eq.s32.totalorder %s16, 0
    %p147 = por %p145, %p146
    %p148 = scmp.ne.s32.totalorder %s134, %s135
    %p149 = scmp.eq.s32.totalorder %s17, 3
    %p150 = por %p148, %p149
    %p152 = scmp.ne.s32.totalorder %s135, %s151
    %p153 = scmp.eq.s32.totalorder %s17, 0
    %p154 = por %p152, %p153
    %p155 = scmp.le.s32.totalorder 1, %s11
    %p156 = scmp.lt.s32.totalorder %s11, 5
    %p157 = pnand %p155, %p156
    %p158 = pneg %p157
    // Predicated region
    $region9: #{tpu_custom_call.1} parent=5 // pred_check
      _
    $region10: #{tpu_custom_call.1} parent=5 // pred_check_branch
      %160 = sbr.rel (%p157) target = $region12
    $region11: #{tpu_custom_call.1} parent=5 // pred_region
      %s161 = ssub.s32 %s11, 1
      // Predicated region
      $region13: #{tpu_custom_call.1} parent=11 // pred_check
        %p162 = pneg %p58
      $region14: #{tpu_custom_call.1} parent=11 // pred_check_branch
        %164 = sbr.rel (%p162) target = $region16
      $region15: #{tpu_custom_call.1} parent=11 // pred_region
        _
      $region16: #{tpu_custom_call.1} parent=11 // pred_fallthru
        _
      // Predicated region
      $region17: #{tpu_custom_call.1} parent=11 // pred_check
        %p165 = pneg %p79
      $region18: #{tpu_custom_call.1} parent=11 // pred_check_branch
        %167 = sbr.rel (%p165) target = $region20
      $region19: #{tpu_custom_call.1} parent=11 // pred_region
        _
      $region20: #{tpu_custom_call.1} parent=11 // pred_fallthru
        _
      // Predicated region
      $region21: #{tpu_custom_call.1} parent=11 // pred_check
        %p168 = pneg %p100
      $region22: #{tpu_custom_call.1} parent=11 // pred_check_branch
        %170 = sbr.rel (%p168) target = $region24
      $region23: #{tpu_custom_call.1} parent=11 // pred_region
        _
      $region24: #{tpu_custom_call.1} parent=11 // pred_fallthru
        _
      // Predicated region
      $region25: #{tpu_custom_call.1} parent=11 // pred_check
        %p171 = pneg %p121
      $region26: #{tpu_custom_call.1} parent=11 // pred_check_branch
        %173 = sbr.rel (%p171) target = $region28
      $region27: #{tpu_custom_call.1} parent=11 // pred_region
        _
      $region28: #{tpu_custom_call.1} parent=11 // pred_fallthru
        _
    $region12: #{tpu_custom_call.1} parent=5 // pred_fallthru
      _
    %p174 = scmp.lt.s32.totalorder %s11, 4
    // Predicated region
    $region29: #{tpu_custom_call.1} parent=5 // pred_check
      %p175 = pneg %p174
    $region30: #{tpu_custom_call.1} parent=5 // pred_check_branch
      %177 = sbr.rel (%p175) target = $region32
    $region31: #{tpu_custom_call.1} parent=5 // pred_region
      // Predicated region
      $region33: #{tpu_custom_call.1} parent=31 // pred_check
        %p178 = pneg %p31
      $region34: #{tpu_custom_call.1} parent=31 // pred_check_branch
        %180 = sbr.rel (%p178) target = $region36
      $region35: #{tpu_custom_call.1} parent=31 // pred_region
        %s181 = smul.u32 2, %s11
        %p182 = scmp.lt.s32.totalorder %s181, 7
        %s183 = scalar_select %p182, %s181, 7
        %s184 = smul.addr %s183, 8
        %s185 = scalar_lea.vmem %s0, %s184
        %s186 = smul.u32 2, %s11
      $region36: #{tpu_custom_call.1} parent=31 // pred_fallthru
        _
    $region32: #{tpu_custom_call.1} parent=5 // pred_fallthru
      _
    %p187 = scmp.le.s32.totalorder 1, %s11
    %p188 = scmp.lt.s32.totalorder %s11, 5
    %p189 = pnand %p187, %p188
    %p190 = pneg %p189
    // Predicated region
    $region37: #{tpu_custom_call.1} parent=5 // pred_check
      _
    $region38: #{tpu_custom_call.1} parent=5 // pred_check_branch
      %192 = sbr.rel (%p189) target = $region40
    $region39: #{tpu_custom_call.1} parent=5 // pred_region
      %s193 = ssub.s32 %s11, 1
      %s194 = smul.u32 2, %s16
      %p195 = scmp.lt.s32.totalorder %s194, 7
      %s196 = scalar_select %p195, %s194, 7
      %s197 = smul.addr %s196, 8
      %s198 = scalar_lea.vmem %s0, %s197
      %p199 = pneg %p37
      %p200 = pneg %p34
      %p201 = pneg %p58
      %p202 = pneg %p55
      %p203 = pneg %p79
      %p204 = pneg %p76
      %p205 = pneg %p100
      %p206 = pneg %p97
      %p207 = pneg %p121
      %p208 = pneg %p118
      %p209 = pneg %p147
      %p210 = pneg %p144
      %s211 = smul.u32 2, %s16
      %p212 = scmp.lt.s32.totalorder %s211, 7
      %s213 = scalar_select %p212, %s211, 7
      %s214 = smul.addr %s213, 8
      %s215 = scalar_lea.vmem %s5, %s214
      %s216 = smul.u32 2, %s16
      %p217 = scmp.lt.s32.totalorder %s216, 7
      %s218 = scalar_select %p217, %s216, 7
      %s219 = smul.addr %s218, 8
      %s220 = scalar_lea.vmem %s0, %s219
      %s221 = smul.u32 2, %s16
      %s222 = smul.u32 2, %s16
      %p223 = scmp.lt.s32.totalorder %s222, 7
      %s224 = scalar_select %p223, %s222, 7
      %s225 = smul.addr %s224, 8
      %s226 = scalar_lea.vmem %s5, %s225
      %s227 = smul.u32 2, %s16
      %v229 = vld [vmem:[%s220] sm:$0xff]
      %v230 = vld [vmem:[%s220 + $0x8] sm:$0xff]
      %v231 = vpack.c.bf16 %v230, %v229
      %v232 = vld [vmem:[%s1] sm:$0xf]
      %v233 = vld [vmem:[%s1 + $0x4] sm:$0xf]
      %v234 = vld [vmem:[%s1 + $0x8] sm:$0xf]
      %v235 = vld [vmem:[%s1 + $0xc] sm:$0xf]
      %v236 = vld [vmem:[%s2] sm:$0x1]
      %v238 = vlaneseq
      %v239 = vshrl.u32 %v238, 7
      %v240 = vsub.s32 0, %v239
      %v241 = vrot.slane %v236, %v240
      %v247 = vunpack.c.l.b16 %v232
      %v248 = vunpack.c.l.b16 %v233
      %v249 = vunpack.c.l.b16 %v234
      %v250 = vunpack.c.l.b16 %v235
      %v251 = vpack.c.b16 %v248, %v247
      %v252 = vpack.c.b16 %v250, %v249
      %vm255 = vcmask 261120
      %v257 = vsel %vm255, %v231, 0
      %259 = vmatprep.subr.bf16.mxu0 0
      %260 = vmatpush1.bf16.msra.mxu0 0
      %261 = vmatprep.subr.bf16.mxu0 0
      %262 = vmatpush1.bf16.msra.mxu0 0
      %263 = vmatprep.subr.bf16.mxu0 0
      %264 = vmatpush1.bf16.msra.mxu0 0
      %265 = vmatprep.subr.bf16.mxu0 0
      %266 = vmatpush1.bf16.msra.mxu0 0
      %267 = vmatprep.subr.bf16.mxu0 0
      %268 = vmatpush1.bf16.msra.mxu0 0
      %269 = vmatprep.subr.bf16.mxu0 0
      %270 = vmatpush1.bf16.msra.mxu0 0
      %271 = vmatprep.subr.bf16.mxu0 0
      %272 = vmatpush1.bf16.msra.mxu0 %v252
      %273 = vmatprep.subr.bf16.mxu0 0
      %274 = vmatpush1.bf16.msra.mxu0 %v251
      %275 = vmatprep.subr.bf16.mxu0 0
      %276 = vmatpush2.bf16.msra.mxu0 0
      %277 = vmatprep.subr.bf16.mxu0 0
      %278 = vmatpush2.bf16.msra.mxu0 0
      %279 = vmatprep.subr.bf16.mxu0 0
      %280 = vmatpush2.bf16.msra.mxu0 0
      %281 = vmatprep.subr.bf16.mxu0 0
      %282 = vmatpush2.bf16.msra.mxu0 0
      %283 = vmatprep.subr.bf16.mxu0 0
      %284 = vmatpush2.bf16.msra.mxu0 0
      %285 = vmatprep.subr.bf16.mxu0 0
      %286 = vmatpush2.bf16.msra.mxu0 0
      %287 = vmatprep.subr.bf16.mxu0 0
      %288 = vmatpush2.bf16.msra.mxu0 0
      %289 = vmatprep.subr.bf16.mxu0 0
      %290 = vmatpush2.bf16.msra.mxu0 0
      %291 = vmatprep.mubr.bf16.mxu0 0
      %292 = vmatmul.mubr.bf16.gmra.mxu0 %v257
      %v293 = vpop.f32.mrf.mxu0
      %v294 = vadd.f32 %v241, %v293
      %v295 = vpop.f32.mrf.mxu0
      %v296 = vpop.f32.mrf.mxu0
      %v297 = vadd.f32 %v241, %v296
      %v298 = vpop.f32.mrf.mxu0
      %299 = vdwg.mxu0
      %v300 = vtanh.pop %v294
      %v301 = vtanh.pop %v297
      %v302 = vpack.c.bf16 %v301, %v300
      %v303 = vld [vmem:[%s3] sm:$0xf]
      %v304 = vld [vmem:[%s3 + $0x4] sm:$0xf]
      %v305 = vld [vmem:[%s3 + $0x8] sm:$0xf]
      %v306 = vld [vmem:[%s3 + $0xc] sm:$0xf]
      %v307 = vld [vmem:[%s4] sm:$0x1]
      %v309 = vlaneseq
      %v310 = vshrl.u32 %v309, 7
      %v311 = vsub.s32 0, %v310
      %v312 = vrot.slane %v307, %v311
      %v318 = vunpack.c.l.b16 %v303
      %v319 = vunpack.c.l.b16 %v304
      %v320 = vunpack.c.l.b16 %v305
      %v321 = vunpack.c.l.b16 %v306
      %v322 = vpack.c.b16 %v319, %v318
      %v323 = vpack.c.b16 %v321, %v320
      %v327 = vsel %vm255, %v302, 0
      %329 = vmatprep.subr.bf16.mxu0 0
      %330 = vmatpush1.bf16.msra.mxu0 0
      %331 = vmatprep.subr.bf16.mxu0 0
      %332 = vmatpush1.bf16.msra.mxu0 0
      %333 = vmatprep.subr.bf16.mxu0 0
      %334 = vmatpush1.bf16.msra.mxu0 0
      %335 = vmatprep.subr.bf16.mxu0 0
      %336 = vmatpush1.bf16.msra.mxu0 0
      %337 = vmatprep.subr.bf16.mxu0 0
      %338 = vmatpush1.bf16.msra.mxu0 0
      %339 = vmatprep.subr.bf16.mxu0 0
      %340 = vmatpush1.bf16.msra.mxu0 0
      %341 = vmatprep.subr.bf16.mxu0 0
      %342 = vmatpush1.bf16.msra.mxu0 %v323
      %343 = vmatprep.subr.bf16.mxu0 0
      %344 = vmatpush1.bf16.msra.mxu0 %v322
      %345 = vmatprep.subr.bf16.mxu0 0
      %346 = vmatpush2.bf16.msra.mxu0 0
      %347 = vmatprep.subr.bf16.mxu0 0
      %348 = vmatpush2.bf16.msra.mxu0 0
      %349 = vmatprep.subr.bf16.mxu0 0
      %350 = vmatpush2.bf16.msra.mxu0 0
      %351 = vmatprep.subr.bf16.mxu0 0
      %352 = vmatpush2.bf16.msra.mxu0 0
      %353 = vmatprep.subr.bf16.mxu0 0
      %354 = vmatpush2.bf16.msra.mxu0 0
      %355 = vmatprep.subr.bf16.mxu0 0
      %356 = vmatpush2.bf16.msra.mxu0 0
      %357 = vmatprep.subr.bf16.mxu0 0
      %358 = vmatpush2.bf16.msra.mxu0 0
      %359 = vmatprep.subr.bf16.mxu0 0
      %360 = vmatpush2.bf16.msra.mxu0 0
      %361 = vmatprep.mubr.bf16.mxu0 0
      %362 = vmatmul.mubr.bf16.gmra.mxu0 %v327
      %v363 = vpop.f32.mrf.mxu0
      %v364 = vadd.f32 %v312, %v363
      %v365 = vpop.f32.mrf.mxu0
      %v366 = vpop.f32.mrf.mxu0
      %v367 = vadd.f32 %v312, %v366
      %v368 = vpop.f32.mrf.mxu0
      %369 = vdwg.mxu0
      %vm370 = vcmask 64512
      %371 = vst.msk [vmem:[%s226] sm:$0xff] %vm370, %v364
      %372 = vst.msk [vmem:[%s226 + $0x8] sm:$0xff] %vm370, %v367
      %s373 = smul.u32 2, %s16
      %p374 = scmp.lt.s32.totalorder %s373, 7
      %s375 = scalar_select %p374, %s373, 7
      %s376 = smul.addr %s375, 8
      %s377 = scalar_lea.vmem %s5, %s376
      // Predicated region
      $region41: #{tpu_custom_call.1} parent=39 // pred_check
        %p378 = pneg %p144
      $region42: #{tpu_custom_call.1} parent=39 // pred_check_branch
        %380 = sbr.rel (%p378) target = $region44
      $region43: #{tpu_custom_call.1} parent=39 // pred_region
        %s381 = smul.u32 2, %s16
      $region44: #{tpu_custom_call.1} parent=39 // pred_fallthru
        _
    $region40: #{tpu_custom_call.1} parent=5 // pred_fallthru
      _
    %p382 = scmp.le.s32.totalorder 2, %s11
    // Predicated region
    $region45: #{tpu_custom_call.1} parent=5 // pred_check
      %p383 = pneg %p382
    $region46: #{tpu_custom_call.1} parent=5 // pred_check_branch
      %385 = sbr.rel (%p383) target = $region48
    $region47: #{tpu_custom_call.1} parent=5 // pred_region
      %s386 = ssub.s32 %s11, 2
      // Predicated region
      $region49: #{tpu_custom_call.1} parent=47 // pred_check
        %p387 = pneg %p150
      $region50: #{tpu_custom_call.1} parent=47 // pred_check_branch
        %389 = sbr.rel (%p387) target = $region52
      $region51: #{tpu_custom_call.1} parent=47 // pred_region
        %s390 = smul.u32 2, %s17
        %p391 = scmp.lt.s32.totalorder %s390, 7
        %s392 = scalar_select %p391, %s390, 7
        %s393 = smul.addr %s392, 8
        %s394 = scalar_lea.vmem %s5, %s393
      $region52: #{tpu_custom_call.1} parent=47 // pred_fallthru
        _
    $region48: #{tpu_custom_call.1} parent=5 // pred_fallthru
      _
  $region6: #{tpu_custom_call.1} parent=0 // loop_footer
    %s15 = sadd.s32 1, %s11
  $region7: #{tpu_custom_call.1} parent=0 // loop_footer_branch
    %10 = sbr.rel target = $region3
  $region8: #{tpu_custom_call.1} parent=0 // loop_exit
    _

</llo_original>
